<compile_context>
chip_gen: v7x
topology: tpu7x:2x2x1
jax: 0.10.0
libtpu: 0.0.40
codegen_flags: <defaults>
</compile_context>

<pallas_src>
import functools

import jax
import jax.numpy as jnp
from jax import lax
from jax.experimental import pallas as pl
from jax.experimental.pallas import tpu as pltpu


_ROW_GROUP = 128          # rows per register-accumulator group (2 x 16 f32 carry vregs)
_UNROLL_STRIPS = 16       # fully unroll strip loops up to this many 128-lane strips
_MAX_ROWS_MULTI = 512     # rows/tile cap when the spatial axis is chunked (scratch alive)
_MAX_ROWS_SINGLE = 4096   # rows/tile cap in the single-chunk regime (no scratch)


def _row_groups(rows_tile):
    """Static (start, size) row sub-groups so register carries stay <= 2 x 16 vregs."""
    out, g0 = [], 0
    while g0 < rows_tile:
        gr = min(_ROW_GROUP, rows_tile - g0)
        out.append((g0, gr))
        g0 += gr
    return out


def _accum_strips(x_ref, g0, gr, n_strips, mx, sm):
    """Fold n_strips full 128-lane strips of rows [g0, g0+gr) into register carries.

    mx / sm are (gr, 128) float32 values carried in vregs; VMEM accumulators are only
    touched once per chunk by the caller, so each input vreg costs 1 vld + 2 VALU here.
    """
    if n_strips == 0:
        return mx, sm
    if n_strips <= _UNROLL_STRIPS:
        for s in range(n_strips):
            strip = x_ref[g0:g0 + gr, s * 128:(s + 1) * 128].astype(jnp.float32)
            mx = jnp.maximum(mx, strip)
            sm = sm + strip
        return mx, sm

    def body(s, carry):
        cmx, csm = carry
        start = pl.multiple_of(s * 128, 128)
        strip = x_ref[g0:g0 + gr, pl.ds(start, 128)].astype(jnp.float32)
        return jnp.maximum(cmx, strip), csm + strip

    return lax.fori_loop(0, n_strips, body, (mx, sm))


def _reduce_and_store(o_ref, x_ref, g0, gr, mx, sm, rem_start, rem_w, L):
    """Lane-reduce the carries (plus an optional <128-wide tail strip); write one group."""
    if mx is not None:
        row_mx = jnp.max(mx, axis=-1)            # one XLU lane-reduce per accumulator
        row_sm = jnp.sum(sm, axis=-1)
        if rem_w > 0:
            tail = x_ref[g0:g0 + gr, rem_start:rem_start + rem_w].astype(jnp.float32)
            row_mx = jnp.maximum(row_mx, jnp.max(tail, axis=-1))
            row_sm = row_sm + jnp.sum(tail, axis=-1)
    else:  # no full strips at all (L < 128)
        tail = x_ref[g0:g0 + gr, rem_start:rem_start + rem_w].astype(jnp.float32)
        row_mx = jnp.max(tail, axis=-1)
        row_sm = jnp.sum(tail, axis=-1)
    o_ref[0, g0:g0 + gr] = row_mx.astype(o_ref.dtype)
    o_ref[1, g0:g0 + gr] = (row_sm / jnp.float32(L)).astype(o_ref.dtype)


def _acp_kernel_single(x_ref, o_ref, *, L, rows_tile):
    """Fast path (n_k == 1): whole spatial extent in one block; no scratch, no phases."""
    n_full = L // 128
    rem_w = L - n_full * 128
    for g0, gr in _row_groups(rows_tile):
        if n_full > 0:
            mx = jnp.full((gr, 128), -jnp.inf, dtype=jnp.float32)
            sm = jnp.zeros((gr, 128), dtype=jnp.float32)
            mx, sm = _accum_strips(x_ref, g0, gr, n_full, mx, sm)
            _reduce_and_store(o_ref, x_ref, g0, gr, mx, sm, n_full * 128, rem_w, L)
        else:
            _reduce_and_store(o_ref, x_ref, g0, gr, None, None, 0, rem_w, L)


def _acp_kernel_multi(x_ref, o_ref, max_acc, sum_acc, *, L, hw_chunk, n_k, rows_tile):
    """Streaming path (n_k >= 2): hw chunks are 128-lane multiples; only last is partial."""
    k = pl.program_id(1)
    n_strips_full = hw_chunk // 128
    tail_valid = L - (n_k - 1) * hw_chunk        # valid columns of the last chunk (static)
    last_full = tail_valid // 128
    last_rem = tail_valid - last_full * 128

    @pl.when(k == 0)
    def _init():
        max_acc[...] = jnp.full(max_acc.shape, -jnp.inf, dtype=max_acc.dtype)
        sum_acc[...] = jnp.zeros(sum_acc.shape, dtype=sum_acc.dtype)

    @pl.when(k < n_k - 1)
    def _full_chunk():
        # Every column valid: no masks anywhere on the hot path.
        for g0, gr in _row_groups(rows_tile):
            mx = max_acc[g0:g0 + gr, :]
            sm = sum_acc[g0:g0 + gr, :]
            mx, sm = _accum_strips(x_ref, g0, gr, n_strips_full, mx, sm)
            max_acc[g0:g0 + gr, :] = mx          # one scratch RMW per chunk per group
            sum_acc[g0:g0 + gr, :] = sm

    @pl.when(k == n_k - 1)
    def _last_chunk():
        # Finalize: fold remaining full strips + the narrow tail, reduce, write output.
        for g0, gr in _row_groups(rows_tile):
            mx = max_acc[g0:g0 + gr, :]
            sm = sum_acc[g0:g0 + gr, :]
            mx, sm = _accum_strips(x_ref, g0, gr, last_full, mx, sm)
            _reduce_and_store(o_ref, x_ref, g0, gr, mx, sm, last_full * 128, last_rem, L)


def adaptive_concat_pool2d(x, *, target_tile_bytes=None):
    """x: (N, C, H, W) -> (N, 2*C, 1, 1); channels [0:C) = max, [C:2C) = avg."""
    N, C, H, W = x.shape
    R = N * C
    L = H * W
    x2 = x.reshape(R, L)
    itemsize = jnp.dtype(x.dtype).itemsize

    # Generation-aware tile budget: ~VMEM/6 per input buffer (double-buffered),
    # capped at 16 MiB (v5e/v6e: 128 MiB VMEM) and ~10.6 MiB on v7x (64 MiB VMEM).
    vmem_cap = 64 << 20
    try:
        vmem_cap = int(getattr(pltpu.get_tpu_info(), "vmem_capacity_bytes", vmem_cap))
    except Exception:
        pass
    if target_tile_bytes is None:
        target_tile_bytes = int(min(16 << 20, max(4 << 20, vmem_cap // 6)))

    # Row tiling. Output layout is (2, R): rows_tile must be R or a multiple of 128;
    # keep >= 2 row tiles when R >= 256 so both v7x TensorCores get work.
    if R >= 256:
        rows_tile = min(_MAX_ROWS_MULTI, (R // 2) // 128 * 128)
    else:
        rows_tile = R

    budget_cols = max(128, (target_tile_bytes // (max(rows_tile, 1) * itemsize)) // 128 * 128)

    if L <= budget_cols:
        hw_chunk, n_k = L, 1
        # Single-chunk regime: no scratch; grow rows/tile toward the byte budget to
        # amortize per-grid-step overhead (still >= 2 row tiles when R allows).
        if R >= 256:
            rows_by_budget = max(128, (target_tile_bytes // (max(L, 1) * itemsize)) // 128 * 128)
            rows_tile = max(128, min(rows_by_budget, (R // 2) // 128 * 128, _MAX_ROWS_SINGLE))
    else:
        hw_chunk = budget_cols
        n_k = pl.cdiv(L, hw_chunk)

    n_i = pl.cdiv(R, rows_tile)

    if n_k == 1:
        kernel = functools.partial(_acp_kernel_single, L=L, rows_tile=rows_tile)
        scratch_shapes = []
        scratch_bytes = 0
    else:
        kernel = functools.partial(_acp_kernel_multi, L=L, hw_chunk=hw_chunk,
                                   n_k=n_k, rows_tile=rows_tile)
        scratch_shapes = [pltpu.VMEM((rows_tile, 128), jnp.float32),   # running max
                          pltpu.VMEM((rows_tile, 128), jnp.float32)]   # running sum
        scratch_bytes = 2 * rows_tile * 128 * 4

    # Explicit VMEM limit: 2 double-buffered input tiles + scratch + headroom, clamped
    # to the chip's capacity (keeps big tiles legal on v6e, safe on v7x's 64 MiB).
    def _rup(a, m):
        return ((a + m - 1) // m) * m
    tile_buf = _rup(rows_tile, 32) * _rup(hw_chunk, 128) * itemsize
    vmem_limit = int(min(vmem_cap, max(32 << 20, 2 * tile_buf + scratch_bytes + (4 << 20))))

    out = pl.pallas_call(
        kernel,
        out_shape=jax.ShapeDtypeStruct((2, R), x.dtype),
        grid_spec=pltpu.PrefetchScalarGridSpec(
            num_scalar_prefetch=0,
            grid=(n_i, n_k),
            in_specs=[pl.BlockSpec((rows_tile, hw_chunk), lambda i, k: (i, k))],
            out_specs=pl.BlockSpec((2, rows_tile), lambda i, k: (0, i)),
            scratch_shapes=scratch_shapes,
        ),
        compiler_params=pltpu.CompilerParams(
            dimension_semantics=("parallel", "arbitrary"),
            vmem_limit_bytes=vmem_limit,
        ),
    )(x2)

    mx = out[0].reshape(N, C, 1, 1)
    av = out[1].reshape(N, C, 1, 1)
    return jnp.concatenate([mx, av], axis=1)


def _ref_pool(x):
    return jnp.concatenate(
        [jnp.max(x, axis=(2, 3), keepdims=True),
         jnp.mean(x, axis=(2, 3), keepdims=True)],
        axis=1,
    )


if __name__ == "__main__":
    # Primary case from the module spec.
    x = jax.random.normal(jax.random.PRNGKey(0), (2, 4, 16, 16), dtype=jnp.float32)
    y = jax.block_until_ready(adaptive_concat_pool2d(x))
    assert y.shape == (2, 8, 1, 1)
    assert jnp.allclose(y, _ref_pool(x), atol=1e-5, rtol=1e-5)

    # Odd spatial size: single-chunk path with no full 128-lane strips (L = 99 < 128).
    x2 = jax.random.normal(jax.random.PRNGKey(1), (1, 3, 9, 11), dtype=jnp.float32)
    y2 = jax.block_until_ready(adaptive_concat_pool2d(x2))
    assert y2.shape == (1, 6, 1, 1)
    assert jnp.allclose(y2, _ref_pool(x2), atol=1e-5, rtol=1e-5)

    # R >= 256 with a partial last row tile (n_i > 1), single spatial chunk, L < 128.
    x3 = jax.random.normal(jax.random.PRNGKey(2), (2, 160, 8, 8), dtype=jnp.float32)
    y3 = jax.block_until_ready(adaptive_concat_pool2d(x3))
    assert y3.shape == (2, 320, 1, 1)
    assert jnp.allclose(y3, _ref_pool(x3), atol=1e-5, rtol=1e-5)

    # Multi-chunk spatial path (n_k > 1) with a partial last chunk AND a partial last
    # row tile, forced via a reduced tile budget so the test stays small.
    x4 = jax.random.normal(jax.random.PRNGKey(3), (3, 100, 36, 36), dtype=jnp.float32)
    y4 = jax.block_until_ready(adaptive_concat_pool2d(x4, target_tile_bytes=256 << 10))
    assert y4.shape == (3, 200, 1, 1)
    assert jnp.allclose(y4, _ref_pool(x4), atol=1e-5, rtol=1e-5)

    print("KERNEL_OK")
</pallas_src>

<mosaic_0001>
module attributes {stable_mosaic.version = 11 : i64} {
  func.func @_acp_kernel_single(%arg0: i32, %arg1: i32, %arg2: memref<8x256xf32, #tpu.memory_space<vmem>>, %arg3: memref<2x8xf32, #tpu.memory_space<vmem>>) attributes {dimension_semantics = [#tpu.dimension_semantics<parallel>, #tpu.dimension_semantics<arbitrary>], iteration_bounds = array<i64: 1, 1>, scalar_prefetch = 0 : i64, scratch_operands = 0 : i64, tpu.core_type = #tpu.core_type<tc>, window_params = [{transform_indices = @transform_0, window_bounds = array<i64: 8, 256>}, {transform_indices = @transform_1, window_bounds = array<i64: 2, 8>}]} {
    %cst = arith.constant 0xFF800000 : f32
    %0 = vector.broadcast %cst : f32 to vector<8x128xf32>
    %cst_0 = arith.constant 0.000000e+00 : f32
    %1 = vector.broadcast %cst_0 : f32 to vector<8x128xf32>
    %c0 = arith.constant 0 : index
    %c0_1 = arith.constant 0 : index
    %2 = vector.load %arg2[%c0, %c0_1] : memref<8x256xf32, #tpu.memory_space<vmem>>, vector<8x128xf32>
    %3 = arith.maximumf %0, %2 : vector<8x128xf32>
    %4 = arith.addf %1, %2 : vector<8x128xf32>
    %c0_2 = arith.constant 0 : index
    %c128 = arith.constant 128 : index
    %5 = vector.load %arg2[%c0_2, %c128] : memref<8x256xf32, #tpu.memory_space<vmem>>, vector<8x128xf32>
    %6 = arith.maximumf %3, %5 : vector<8x128xf32>
    %7 = arith.addf %4, %5 : vector<8x128xf32>
    %cst_3 = arith.constant dense<0xFF800000> : vector<8xf32>
    %8 = vector.multi_reduction <maximumf>, %6, %cst_3 [1] : vector<8x128xf32> to vector<8xf32>
    %cst_4 = arith.constant dense<0.000000e+00> : vector<8xf32>
    %9 = vector.multi_reduction <add>, %7, %cst_4 [1] : vector<8x128xf32> to vector<8xf32>
    %c0_5 = arith.constant 0 : index
    %c0_6 = arith.constant 0 : index
    %10 = vector.load %arg3[%c0_5, %c0_6] : memref<2x8xf32, #tpu.memory_space<vmem>>, vector<1x8xf32>
    %11 = vector.shape_cast %10 : vector<1x8xf32> to vector<8xf32>
    %12 = vector.shape_cast %8 : vector<8xf32> to vector<1x8xf32>
    tpu.vector_store %arg3[%c0_5, %c0_6], %12 {strides = array<i32>} : memref<2x8xf32, #tpu.memory_space<vmem>>, vector<1x8xf32>,
    %cst_7 = arith.constant 2.560000e+02 : f32
    %13 = vector.broadcast %cst_7 : f32 to vector<8xf32>
    %14 = arith.divf %9, %13 : vector<8xf32>
    %c1 = arith.constant 1 : index
    %c0_8 = arith.constant 0 : index
    %15 = vector.load %arg3[%c1, %c0_8] : memref<2x8xf32, #tpu.memory_space<vmem>>, vector<1x8xf32>
    %16 = vector.shape_cast %15 : vector<1x8xf32> to vector<8xf32>
    %17 = vector.shape_cast %14 : vector<8xf32> to vector<1x8xf32>
    tpu.vector_store %arg3[%c1, %c0_8], %17 {strides = array<i32>} : memref<2x8xf32, #tpu.memory_space<vmem>>, vector<1x8xf32>,
    return
  }
  func.func @transform_0(%arg0: i32, %arg1: i32) -> (i32, i32) {
    %c0_i32 = arith.constant 0 : i32
    return %arg0, %arg1 : i32, i32
  }
  func.func @transform_1(%arg0: i32, %arg1: i32) -> (i32, i32) {
    %c0_i32 = arith.constant 0 : i32
    %c0_i32_0 = arith.constant 0 : i32
    return %c0_i32, %arg0 : i32, i32
  }
}

</mosaic_0001>

<llo_original>
// kernel: tpu_custom_call.1
$region0: #{tpu_custom_call.1}
  #allocation0 [shape = 'u32[]', space=smem, size = 0x4, offset = 0x4, fixed_abs, tag = 'smem constant byte address 0x4 - core index']
  #allocation1 [shape = 'u32[144,128]{1,0:T(1,128)}', space=vmem, size = 0x12000, scoped, tag = 'internal scratch']
  %s0 = inlined_call_operand.hbm [shape: f32[8,256], index: 0, kind: input, shape index: {}]
  %s1 = inlined_call_operand.hbm [shape: f32[2,8], index: 1, kind: output, shape index: {}]
  %s2 = sld [smem:[#allocation0]]
  $region18: #{tpu_custom_call.1} parent=0
    _
  %s4 = ssub.s32 1, %s2
  %s5 = scalar_select 0, %s4, %s2
  $region1: #{tpu_custom_call.1} parent=0
    #allocation2 [shape = 'u8[8192]{0}', space=vmem, size = 0x2000, scoped, tag = 'input window, operand 0, single buffered']
    #allocation3 [shape = 's32[1]{0}', space=sflag, size = 0x4, scoped, tag = 'scoped memory for tpu_custom_call.1']
    #allocation4 [shape = 's32[1]{0}', space=sflag, size = 0x4, scoped, tag = 'scoped memory for tpu_custom_call.1']
    #allocation5 [shape = 'u8[1024]{0}', space=vmem, size = 0x400, scoped, tag = 'output window, operand 0, single buffered']
    %6 = vsyncpa [#allocation3], 0
    %7 = vsyncpa [#allocation4], 0
    // Predicated region
    $region2: #{tpu_custom_call.1} parent=1 // pred_check
      _
    $region3: #{tpu_custom_call.1} parent=1 // pred_check_branch
      %9 = sbr.rel (0) target = $region5
    $region4: #{tpu_custom_call.1} parent=1 // pred_region
      %s11 = ssub.s32 256, 256
      %12 = vsyncadd [#allocation3], %s11
      %s14 = sshll.u32 [#allocation2], 4
      %s15 = int_to_ptr.vmem [resolvable:$true] %s14
      %17 = dma.hbm_to_vmem [thread:$0]  %s0, 256, %s15, [#allocation3]
    $region5: #{tpu_custom_call.1} parent=1 // pred_fallthru
      _
    // Predicated region
    $region6: #{tpu_custom_call.1} parent=1 // pred_check
      _
    $region7: #{tpu_custom_call.1} parent=1 // pred_check_branch
      %19 = sbr.rel (0) target = $region9
    $region8: #{tpu_custom_call.1} parent=1 // pred_region
      %20 = dma.done [#allocation3], 256
    $region9: #{tpu_custom_call.1} parent=1 // pred_fallthru
      _
    %v21 = vld [vmem:[#allocation2] sm:$0xff]
    %v22 = vadd.f32 %v21, 0.0
    %v23 = vld [vmem:[#allocation2 + $0x8] sm:$0xff]
    %v24 = vmax.f32 %v21, %v23
    %v25 = vadd.f32 %v22, %v23
    %26 = vmax.xlane.f32.xlu0 %v24
    %v27 = vpop.xlane.xlu0 %26
    %28 = vadd.xlane.f32.xlu0 %v25
    %v29 = vpop.xlane.xlu0 %28
    %v31 = vlaneseq
    %v32 = vand.u32 %v31, 127
    %v33 = vlaneseq
    %v34 = vshrl.u32 %v33, 7
    %v35 = vsub.s32 %v32, %v34
    %v36 = vrot.slane %v27, %v35
    %vm38 = vcmask 57344
    %39 = vst.msk [vmem:[#allocation5] sm:$0x1] %vm38, %v36
    %v40 = vrcp.pop 256.0
    %v41 = vmul.f32 %v29, %v40
    %v43 = vlaneseq
    %v44 = vshrl.u32 %v43, 7
    %v45 = vsub.s32 %v32, %v44
    %v46 = vrot.slane %v41, %v45
    %48 = vst.msk [vmem:[#allocation5 + $0x1] sm:$0x1] %vm38, %v46
    // Predicated region
    $region10: #{tpu_custom_call.1} parent=1 // pred_check
      _
    $region11: #{tpu_custom_call.1} parent=1 // pred_check_branch
      %50 = sbr.rel (0) target = $region13
    $region12: #{tpu_custom_call.1} parent=1 // pred_region
      %s52 = ssub.s32 32, 32
      %53 = vsyncadd [#allocation4], %s52
      %s55 = sshll.u32 [#allocation5], 4
      %s56 = int_to_ptr.vmem [resolvable:$true] %s55
      %58 = dma.vmem_to_hbm [thread:$0]  %s56, 32, %s1, [#allocation4]
    $region13: #{tpu_custom_call.1} parent=1 // pred_fallthru
      _
    // Predicated region
    $region14: #{tpu_custom_call.1} parent=1 // pred_check
      _
    $region15: #{tpu_custom_call.1} parent=1 // pred_check_branch
      %60 = sbr.rel (0) target = $region17
    $region16: #{tpu_custom_call.1} parent=1 // pred_region
      %61 = dma.done [#allocation4], 32
    $region17: #{tpu_custom_call.1} parent=1 // pred_fallthru
      _
    %62 = vsyncpa [#allocation3], 1
    %63 = vsyncpa [#allocation4], 1

</llo_original>
